<compile_context>
chip_gen: v7x
topology: tpu7x:2x2x1
jax: 0.10.0
libtpu: 0.0.40
codegen_flags: <defaults>
</compile_context>

<pallas_src>
import jax
import jax.numpy as jnp
from jax.experimental import pallas as pl
from jax.experimental.pallas import tpu as pltpu


def _sigmoid(x):
    # sigmoid(x) == 0.5*tanh(x/2) + 0.5 : exact identity, single EUP tanh instead of
    # the multi-op VPU sequence an exact f32 divide would generate.
    return 0.5 * jnp.tanh(0.5 * x) + 0.5


def decoder_kernel(
    emb_ref,     # (B, emb)          embedded tokens (eval-mode dropout = identity)
    hid_ref,     # (B, H)            previous decoder hidden state
    encf_ref,    # (B*S, 2*enc)      encoder outputs, batch-major, flattened
    enc3_ref,    # (B, S, 2*enc)     encoder outputs, batch-major, 3-D view
    wh_ref,      # (H, H)            attn weight (hidden part), transposed
    we_ref,      # (2*enc, H)        attn weight (encoder part), transposed
    battn_ref,   # (1, H)
    v_ref,       # (1, H)
    wih_ref,     # (emb+2*enc, 3H)   GRU W_ih^T, gates stacked on lanes [r|z|n]
    bih_ref,     # (1, 3H)
    whh_ref,     # (H, 3H)           GRU W_hh^T, gates stacked on lanes [r|z|n]
    bhh_ref,     # (1, 3H)
    wfc_h_ref,   # (H, V)            fc_out weight (output part), transposed
    wfc_x_ref,   # (emb+2*enc, V)    fc_out weight ([embedded|weighted] cols), transposed
    bfc_ref,     # (1, V)
    out_ref,     # (B, P)            packed lane-dense output [pred | hidden | attn | 0]
):
    B, S, enc2 = enc3_ref.shape
    H = hid_ref.shape[1]
    V = bfc_ref.shape[1]

    emb = emb_ref[...]                                                    # (B, emb)
    hid = hid_ref[...]                                                    # (B, H)

    # ---------- Attention (whole batch fused; bias folded into hidden proj) ----------
    hid_proj = (jnp.dot(hid, wh_ref[...], preferred_element_type=jnp.float32)
                + battn_ref[...])                                         # (B, H)
    enc_proj = jnp.dot(encf_ref[...], we_ref[...],
                       preferred_element_type=jnp.float32)                # (B*S, H)
    energy = jnp.tanh(enc_proj.reshape(B, S, H) + hid_proj[:, None, :])   # (B, S, H)
    # score via VPU multiply + lane reduce (no N=1 matmul / transpose)
    score = jnp.sum(energy * v_ref[...], axis=-1)                         # (B, S)

    # numerically stable softmax over src_len; approx reciprocal on the idle EUP slot
    m = jnp.max(score, axis=-1, keepdims=True)
    p = jnp.exp(score - m)
    a = p * pl.reciprocal(jnp.sum(p, axis=-1, keepdims=True), approx=True)  # (B, S)

    # ---------- Context vector: weighted = bmm(a, enc) ----------
    weighted = jnp.sum(a[:, :, None] * enc3_ref[...], axis=1)             # (B, 2*enc)

    # ---------- GRU cell: gates stacked along lanes -> 2 matmuls total ----------
    x = jnp.concatenate([emb, weighted], axis=1)                          # (B, emb+2*enc)
    gi = jnp.dot(x, wih_ref[...], preferred_element_type=jnp.float32) + bih_ref[...]    # (B, 3H)
    gh = jnp.dot(hid, whh_ref[...], preferred_element_type=jnp.float32) + bhh_ref[...]  # (B, 3H)
    rz = _sigmoid(gi[:, :2 * H] + gh[:, :2 * H])                          # (B, 2H)  [r | z]
    r = rz[:, :H]
    z = rz[:, H:]
    n = jnp.tanh(gi[:, 2 * H:] + r * gh[:, 2 * H:])
    h_new = (1.0 - z) * n + z * hid                                       # (B, H)

    # ---------- fc_out( cat(output, weighted, embedded) ): 2 matmuls, x reused ----------
    pred = (jnp.dot(h_new, wfc_h_ref[...], preferred_element_type=jnp.float32)
            + jnp.dot(x, wfc_x_ref[...], preferred_element_type=jnp.float32)
            + bfc_ref[...])                                               # (B, V)

    # ---------- single lane-dense packed store (1 unmasked vst, 1 writeback DMA) ----------
    pad = out_ref.shape[1] - (V + H + S)
    pieces = [pred, h_new, a]
    if pad > 0:
        pieces.append(jnp.zeros((B, pad), jnp.float32))
    out_ref[...] = jnp.concatenate(pieces, axis=1).astype(out_ref.dtype)


def _full_spec(shape):
    zeros = (0,) * len(shape)

    def index_map(i):
        return zeros

    return pl.BlockSpec(shape, index_map)


def decoder_forward(tokens, hidden, encoder_outputs, params):
    """
    tokens:          (batch,)  int32
    hidden:          (batch, dec_hid)
    encoder_outputs: (src_len, batch, 2*enc_hid)
    params:          dict of PyTorch-layout weights (see __main__)
    returns: (prediction (B, V), new_hidden (B, H), attention (B, S))
    """
    src_len, batch, enc2 = encoder_outputs.shape
    dec_hid = hidden.shape[1]
    emb_dim = params["emb_table"].shape[1]
    output_dim = params["w_fc"].shape[0]
    rnn_in = emb_dim + enc2

    # ---- wrapper-side layout plumbing (gather, transposes, weight packing) ----
    # Embedding lookup + eval-mode dropout (identity).
    # TODO(synk): training-mode dropout RNG not implemented (eval semantics only).
    embedded = jnp.take(params["emb_table"], tokens, axis=0)              # (B, emb)

    enc_bmaj = jnp.transpose(encoder_outputs, (1, 0, 2))                  # (B, S, 2*enc)
    enc_flat = enc_bmaj.reshape(batch * src_len, enc2)                    # (B*S, 2*enc)

    # Attention weight: cat order inside Attention is (hidden, encoder_outputs).
    w_attn = params["w_attn"]
    wh = w_attn[:, :dec_hid].T                                            # (H, H)
    we = w_attn[:, dec_hid:].T                                            # (2*enc, H)
    battn = params["b_attn"].reshape(1, dec_hid)
    v_row = params["v_w"].reshape(1, dec_hid)

    # GRU: PyTorch W_ih is (3H, emb+2enc), gate rows [r,z,n]; rnn_input = cat(emb, weighted)
    # matches the in-kernel x column order, so a plain transpose stacks all 3 gates along
    # the lane axis -> one (B, rnn_in) @ (rnn_in, 3H) matmul per side.
    wih_t = params["w_ih"].T                                              # (rnn_in, 3H)
    whh_t = params["w_hh"].T                                              # (H, 3H)
    bih = params["b_ih"].reshape(1, 3 * dec_hid)
    bhh = params["b_hh"].reshape(1, 3 * dec_hid)

    # fc_out: input column order is (output, weighted, embedded). Re-order the
    # (weighted, embedded) columns to (embedded, weighted) so the kernel reuses x.
    w_fc = params["w_fc"]
    wfc_h = w_fc[:, :dec_hid].T                                           # (H, V)
    wfc_x = jnp.concatenate(
        [w_fc[:, dec_hid + enc2:], w_fc[:, dec_hid:dec_hid + enc2]], axis=1).T  # (rnn_in, V)
    bfc = params["b_fc"].reshape(1, output_dim)

    # Packed lane-dense output width: [pred | hidden | attn] padded up to a multiple of 128.
    packed_w = max(128, -(-(output_dim + dec_hid + src_len) // 128) * 128)

    grid_spec = pltpu.PrefetchScalarGridSpec(
        num_scalar_prefetch=0,
        grid=(1,),  # single fused step: whole problem fits in VMEM at these sizes
        in_specs=[
            _full_spec((batch, emb_dim)),
            _full_spec((batch, dec_hid)),
            _full_spec((batch * src_len, enc2)),
            _full_spec((batch, src_len, enc2)),
            _full_spec((dec_hid, dec_hid)),
            _full_spec((enc2, dec_hid)),
            _full_spec((1, dec_hid)),
            _full_spec((1, dec_hid)),
            _full_spec((rnn_in, 3 * dec_hid)),
            _full_spec((1, 3 * dec_hid)),
            _full_spec((dec_hid, 3 * dec_hid)),
            _full_spec((1, 3 * dec_hid)),
            _full_spec((dec_hid, output_dim)),
            _full_spec((rnn_in, output_dim)),
            _full_spec((1, output_dim)),
        ],
        out_specs=_full_spec((batch, packed_w)),
    )

    packed = pl.pallas_call(
        decoder_kernel,
        out_shape=jax.ShapeDtypeStruct((batch, packed_w), jnp.float32),
        grid_spec=grid_spec,
        compiler_params=pltpu.CompilerParams(dimension_semantics=("arbitrary",)),
    )(embedded, hidden, enc_flat, enc_bmaj, wh, we, battn, v_row,
      wih_t, bih, whh_t, bhh, wfc_h, wfc_x, bfc)

    pred = packed[:, :output_dim]
    h_new = packed[:, output_dim:output_dim + dec_hid]
    a = packed[:, output_dim + dec_hid:output_dim + dec_hid + src_len]
    return pred, h_new, a


def decoder_reference(tokens, hidden, encoder_outputs, params):
    """Pure-JAX reference mirroring the PyTorch Decoder.forward (eval mode)."""
    src_len, batch, enc2 = encoder_outputs.shape
    H = hidden.shape[1]
    emb = params["emb_table"][tokens]                                     # (B, emb)

    # Attention sub-module
    h_rep = jnp.repeat(hidden[:, None, :], src_len, axis=1)
    enc = jnp.transpose(encoder_outputs, (1, 0, 2))
    cat = jnp.concatenate([h_rep, enc], axis=2)
    energy = jnp.tanh(jnp.einsum("bsi,oi->bso", cat, params["w_attn"]) + params["b_attn"])
    attention = jnp.einsum("bso,ko->bsk", energy, params["v_w"])[..., 0]
    a = jax.nn.softmax(attention, axis=1)                                 # (B, S)

    weighted = jnp.einsum("bs,bse->be", a, enc)                           # (B, 2*enc)

    x = jnp.concatenate([emb, weighted], axis=1)
    gi = x @ params["w_ih"].T + params["b_ih"]
    gh = hidden @ params["w_hh"].T + params["b_hh"]
    r = jax.nn.sigmoid(gi[:, :H] + gh[:, :H])
    z = jax.nn.sigmoid(gi[:, H:2 * H] + gh[:, H:2 * H])
    n = jnp.tanh(gi[:, 2 * H:] + r * gh[:, 2 * H:])
    h_new = (1.0 - z) * n + z * hidden

    pred = jnp.concatenate([h_new, weighted, emb], axis=1) @ params["w_fc"].T + params["b_fc"]
    return pred, h_new, a


if __name__ == "__main__":
    batch = 2
    enc_hid_dim = 16
    dec_hid_dim = 32
    emb_dim = 32
    src_len = 8
    output_dim = 64
    enc2 = 2 * enc_hid_dim
    attn_in = enc2 + dec_hid_dim
    rnn_in = enc2 + emb_dim
    fc_in = enc2 + dec_hid_dim + emb_dim

    key = jax.random.PRNGKey(0)
    keys = jax.random.split(key, 13)

    tokens = jax.random.randint(keys[0], (batch,), 0, output_dim, dtype=jnp.int32)
    hidden = jax.random.normal(keys[1], (batch, dec_hid_dim), dtype=jnp.float32)
    encoder_outputs = jax.random.normal(keys[2], (src_len, batch, enc2), dtype=jnp.float32)

    # PyTorch-layout parameters (Linear/GRU weights are (out, in)).
    params = dict(
        emb_table=jax.random.normal(keys[3], (output_dim, emb_dim), jnp.float32) * 0.1,
        w_attn=jax.random.normal(keys[4], (dec_hid_dim, attn_in), jnp.float32) * 0.1,
        b_attn=jax.random.normal(keys[5], (dec_hid_dim,), jnp.float32) * 0.1,
        v_w=jax.random.normal(keys[6], (1, dec_hid_dim), jnp.float32) * 0.1,
        w_ih=jax.random.normal(keys[7], (3 * dec_hid_dim, rnn_in), jnp.float32) * 0.1,
        w_hh=jax.random.normal(keys[8], (3 * dec_hid_dim, dec_hid_dim), jnp.float32) * 0.1,
        b_ih=jax.random.normal(keys[9], (3 * dec_hid_dim,), jnp.float32) * 0.1,
        b_hh=jax.random.normal(keys[10], (3 * dec_hid_dim,), jnp.float32) * 0.1,
        w_fc=jax.random.normal(keys[11], (output_dim, fc_in), jnp.float32) * 0.1,
        b_fc=jax.random.normal(keys[12], (output_dim,), jnp.float32) * 0.1,
    )

    pred, h_new, a = decoder_forward(tokens, hidden, encoder_outputs, params)
    pred, h_new, a = jax.block_until_ready((pred, h_new, a))

    pred_ref, h_ref, a_ref = decoder_reference(tokens, hidden, encoder_outputs, params)

    assert pred.shape == (batch, output_dim)
    assert h_new.shape == (batch, dec_hid_dim)
    assert a.shape == (batch, src_len)
    # Tolerances cover the approximate EUP reciprocal used for the in-kernel softmax
    # denominator (all other math is exact f32).
    tol = 5e-3
    assert jnp.allclose(a, a_ref, atol=tol, rtol=tol), (a, a_ref)
    assert jnp.allclose(h_new, h_ref, atol=tol, rtol=tol), (h_new, h_ref)
    assert jnp.allclose(pred, pred_ref, atol=tol, rtol=tol), (pred, pred_ref)
    assert jnp.allclose(jnp.sum(a, axis=1), jnp.ones((batch,)), atol=tol)

    print("KERNEL_OK")
</pallas_src>

<mosaic_0001>
module attributes {stable_mosaic.version = 11 : i64} {
  func.func @decoder_kernel(%arg0: i32, %arg1: memref<2x32xf32, #tpu.memory_space<vmem>>, %arg2: memref<2x32xf32, #tpu.memory_space<vmem>>, %arg3: memref<16x32xf32, #tpu.memory_space<vmem>>, %arg4: memref<2x8x32xf32, #tpu.memory_space<vmem>>, %arg5: memref<32x32xf32, #tpu.memory_space<vmem>>, %arg6: memref<32x32xf32, #tpu.memory_space<vmem>>, %arg7: memref<1x32xf32, #tpu.memory_space<vmem>>, %arg8: memref<1x32xf32, #tpu.memory_space<vmem>>, %arg9: memref<64x96xf32, #tpu.memory_space<vmem>>, %arg10: memref<1x96xf32, #tpu.memory_space<vmem>>, %arg11: memref<32x96xf32, #tpu.memory_space<vmem>>, %arg12: memref<1x96xf32, #tpu.memory_space<vmem>>, %arg13: memref<32x64xf32, #tpu.memory_space<vmem>>, %arg14: memref<64x64xf32, #tpu.memory_space<vmem>>, %arg15: memref<1x64xf32, #tpu.memory_space<vmem>>, %arg16: memref<2x128xf32, #tpu.memory_space<vmem>>) attributes {dimension_semantics = [#tpu.dimension_semantics<arbitrary>], iteration_bounds = array<i64: 1>, scalar_prefetch = 0 : i64, scratch_operands = 0 : i64, tpu.core_type = #tpu.core_type<tc>, window_params = [{pipeline_mode = #tpu.pipeline_mode<synchronous>, transform_indices = @transform_0, window_bounds = array<i64: 2, 32>}, {pipeline_mode = #tpu.pipeline_mode<synchronous>, transform_indices = @transform_1, window_bounds = array<i64: 2, 32>}, {pipeline_mode = #tpu.pipeline_mode<synchronous>, transform_indices = @transform_2, window_bounds = array<i64: 16, 32>}, {pipeline_mode = #tpu.pipeline_mode<synchronous>, transform_indices = @transform_3, window_bounds = array<i64: 2, 8, 32>}, {pipeline_mode = #tpu.pipeline_mode<synchronous>, transform_indices = @transform_4, window_bounds = array<i64: 32, 32>}, {pipeline_mode = #tpu.pipeline_mode<synchronous>, transform_indices = @transform_5, window_bounds = array<i64: 32, 32>}, {pipeline_mode = #tpu.pipeline_mode<synchronous>, transform_indices = @transform_6, window_bounds = array<i64: 1, 32>}, {pipeline_mode = #tpu.pipeline_mode<synchronous>, transform_indices = @transform_7, window_bounds = array<i64: 1, 32>}, {pipeline_mode = #tpu.pipeline_mode<synchronous>, transform_indices = @transform_8, window_bounds = array<i64: 64, 96>}, {pipeline_mode = #tpu.pipeline_mode<synchronous>, transform_indices = @transform_9, window_bounds = array<i64: 1, 96>}, {pipeline_mode = #tpu.pipeline_mode<synchronous>, transform_indices = @transform_10, window_bounds = array<i64: 32, 96>}, {pipeline_mode = #tpu.pipeline_mode<synchronous>, transform_indices = @transform_11, window_bounds = array<i64: 1, 96>}, {pipeline_mode = #tpu.pipeline_mode<synchronous>, transform_indices = @transform_12, window_bounds = array<i64: 32, 64>}, {pipeline_mode = #tpu.pipeline_mode<synchronous>, transform_indices = @transform_13, window_bounds = array<i64: 64, 64>}, {pipeline_mode = #tpu.pipeline_mode<synchronous>, transform_indices = @transform_14, window_bounds = array<i64: 1, 64>}, {pipeline_mode = #tpu.pipeline_mode<synchronous>, transform_indices = @transform_15, window_bounds = array<i64: 2, 128>}]} {
    %c0 = arith.constant 0 : index
    %c0_0 = arith.constant 0 : index
    %0 = vector.load %arg1[%c0, %c0_0] : memref<2x32xf32, #tpu.memory_space<vmem>>, vector<2x32xf32>
    %c0_1 = arith.constant 0 : index
    %c0_2 = arith.constant 0 : index
    %1 = vector.load %arg2[%c0_1, %c0_2] : memref<2x32xf32, #tpu.memory_space<vmem>>, vector<2x32xf32>
    %c0_3 = arith.constant 0 : index
    %c0_4 = arith.constant 0 : index
    %2 = vector.load %arg5[%c0_3, %c0_4] : memref<32x32xf32, #tpu.memory_space<vmem>>, vector<32x32xf32>
    %cst = arith.constant dense<0.000000e+00> : vector<2x32xf32>
    %3 = tpu.matmul %1, %2, %cst {dimension_numbers = #tpu.dot_dimension_numbers<[1], [0], [0], [1], [0, 0, 1, 1], [], []>} : vector<2x32xf32>, vector<32x32xf32>, vector<2x32xf32> -> vector<2x32xf32>
    %c0_5 = arith.constant 0 : index
    %c0_6 = arith.constant 0 : index
    %4 = vector.load %arg7[%c0_5, %c0_6] : memref<1x32xf32, #tpu.memory_space<vmem>>, vector<1x32xf32>
    %5 = vector.broadcast %4 : vector<1x32xf32> to vector<2x32xf32>
    %6 = arith.addf %3, %5 : vector<2x32xf32>
    %c0_7 = arith.constant 0 : index
    %c0_8 = arith.constant 0 : index
    %7 = vector.load %arg3[%c0_7, %c0_8] : memref<16x32xf32, #tpu.memory_space<vmem>>, vector<16x32xf32>
    %c0_9 = arith.constant 0 : index
    %c0_10 = arith.constant 0 : index
    %8 = vector.load %arg6[%c0_9, %c0_10] : memref<32x32xf32, #tpu.memory_space<vmem>>, vector<32x32xf32>
    %cst_11 = arith.constant dense<0.000000e+00> : vector<16x32xf32>
    %9 = tpu.matmul %7, %8, %cst_11 {dimension_numbers = #tpu.dot_dimension_numbers<[1], [0], [0], [1], [0, 0, 1, 1], [], []>} : vector<16x32xf32>, vector<32x32xf32>, vector<16x32xf32> -> vector<16x32xf32>
    %10 = vector.shape_cast %9 : vector<16x32xf32> to vector<2x8x32xf32>
    %11 = vector.shape_cast %6 : vector<2x32xf32> to vector<2x1x32xf32>
    %12 = vector.broadcast %11 : vector<2x1x32xf32> to vector<2x8x32xf32>
    %13 = arith.addf %10, %12 : vector<2x8x32xf32>
    %14 = math.tanh %13 : vector<2x8x32xf32>
    %c0_12 = arith.constant 0 : index
    %c0_13 = arith.constant 0 : index
    %15 = vector.load %arg8[%c0_12, %c0_13] : memref<1x32xf32, #tpu.memory_space<vmem>>, vector<1x32xf32>
    %16 = vector.shape_cast %15 : vector<1x32xf32> to vector<1x1x32xf32>
    %17 = vector.broadcast %16 : vector<1x1x32xf32> to vector<2x8x32xf32>
    %18 = arith.mulf %14, %17 : vector<2x8x32xf32>
    %cst_14 = arith.constant dense<0.000000e+00> : vector<2x8xf32>
    %19 = vector.multi_reduction <add>, %18, %cst_14 [2] : vector<2x8x32xf32> to vector<2x8xf32>
    %cst_15 = arith.constant dense<0xFF800000> : vector<2xf32>
    %20 = vector.multi_reduction <maximumf>, %19, %cst_15 [1] : vector<2x8xf32> to vector<2xf32>
    %21 = vector.shape_cast %20 : vector<2xf32> to vector<2x1xf32>
    %22 = vector.broadcast %21 : vector<2x1xf32> to vector<2x8xf32>
    %23 = arith.subf %19, %22 : vector<2x8xf32>
    %24 = math.exp %23 : vector<2x8xf32>
    %cst_16 = arith.constant dense<0.000000e+00> : vector<2xf32>
    %25 = vector.multi_reduction <add>, %24, %cst_16 [1] : vector<2x8xf32> to vector<2xf32>
    %26 = vector.shape_cast %25 : vector<2xf32> to vector<2x1xf32>
    %27 = tpu.reciprocal %26 {approx = true} : vector<2x1xf32> -> vector<2x1xf32>
    %28 = vector.broadcast %27 : vector<2x1xf32> to vector<2x8xf32>
    %29 = arith.mulf %24, %28 : vector<2x8xf32>
    %30 = vector.shape_cast %29 : vector<2x8xf32> to vector<2x8x1xf32>
    %c0_17 = arith.constant 0 : index
    %c0_18 = arith.constant 0 : index
    %c0_19 = arith.constant 0 : index
    %31 = vector.load %arg4[%c0_17, %c0_18, %c0_19] : memref<2x8x32xf32, #tpu.memory_space<vmem>>, vector<2x8x32xf32>
    %32 = vector.broadcast %30 : vector<2x8x1xf32> to vector<2x8x32xf32>
    %33 = arith.mulf %32, %31 : vector<2x8x32xf32>
    %cst_20 = arith.constant dense<0.000000e+00> : vector<2x32xf32>
    %34 = vector.multi_reduction <add>, %33, %cst_20 [1] : vector<2x8x32xf32> to vector<2x32xf32>
    %35 = tpu.concatenate %0, %34 in 1 : vector<2x32xf32>, vector<2x32xf32> -> vector<2x64xf32>
    %c0_21 = arith.constant 0 : index
    %c0_22 = arith.constant 0 : index
    %36 = vector.load %arg9[%c0_21, %c0_22] : memref<64x96xf32, #tpu.memory_space<vmem>>, vector<64x96xf32>
    %cst_23 = arith.constant dense<0.000000e+00> : vector<2x96xf32>
    %37 = tpu.matmul %35, %36, %cst_23 {dimension_numbers = #tpu.dot_dimension_numbers<[1], [0], [0], [1], [0, 0, 1, 1], [], []>} : vector<2x64xf32>, vector<64x96xf32>, vector<2x96xf32> -> vector<2x96xf32>
    %c0_24 = arith.constant 0 : index
    %c0_25 = arith.constant 0 : index
    %38 = vector.load %arg10[%c0_24, %c0_25] : memref<1x96xf32, #tpu.memory_space<vmem>>, vector<1x96xf32>
    %39 = vector.broadcast %38 : vector<1x96xf32> to vector<2x96xf32>
    %40 = arith.addf %37, %39 : vector<2x96xf32>
    %c0_26 = arith.constant 0 : index
    %c0_27 = arith.constant 0 : index
    %41 = vector.load %arg11[%c0_26, %c0_27] : memref<32x96xf32, #tpu.memory_space<vmem>>, vector<32x96xf32>
    %cst_28 = arith.constant dense<0.000000e+00> : vector<2x96xf32>
    %42 = tpu.matmul %1, %41, %cst_28 {dimension_numbers = #tpu.dot_dimension_numbers<[1], [0], [0], [1], [0, 0, 1, 1], [], []>} : vector<2x32xf32>, vector<32x96xf32>, vector<2x96xf32> -> vector<2x96xf32>
    %c0_29 = arith.constant 0 : index
    %c0_30 = arith.constant 0 : index
    %43 = vector.load %arg12[%c0_29, %c0_30] : memref<1x96xf32, #tpu.memory_space<vmem>>, vector<1x96xf32>
    %44 = vector.broadcast %43 : vector<1x96xf32> to vector<2x96xf32>
    %45 = arith.addf %42, %44 : vector<2x96xf32>
    %46 = vector.extract_strided_slice %40 {offsets = [0, 0], sizes = [2, 64], strides = [1, 1]} : vector<2x96xf32> to vector<2x64xf32>
    %47 = vector.extract_strided_slice %45 {offsets = [0, 0], sizes = [2, 64], strides = [1, 1]} : vector<2x96xf32> to vector<2x64xf32>
    %48 = arith.addf %46, %47 : vector<2x64xf32>
    %cst_31 = arith.constant 5.000000e-01 : f32
    %49 = vector.broadcast %cst_31 : f32 to vector<2x64xf32>
    %50 = arith.mulf %49, %48 : vector<2x64xf32>
    %51 = math.tanh %50 : vector<2x64xf32>
    %cst_32 = arith.constant 5.000000e-01 : f32
    %52 = vector.broadcast %cst_32 : f32 to vector<2x64xf32>
    %53 = arith.mulf %52, %51 : vector<2x64xf32>
    %cst_33 = arith.constant 5.000000e-01 : f32
    %54 = vector.broadcast %cst_33 : f32 to vector<2x64xf32>
    %55 = arith.addf %53, %54 : vector<2x64xf32>
    %56 = vector.extract_strided_slice %55 {offsets = [0, 0], sizes = [2, 32], strides = [1, 1]} : vector<2x64xf32> to vector<2x32xf32>
    %57 = vector.extract_strided_slice %55 {offsets = [0, 32], sizes = [2, 32], strides = [1, 1]} : vector<2x64xf32> to vector<2x32xf32>
    %58 = vector.extract_strided_slice %40 {offsets = [0, 64], sizes = [2, 32], strides = [1, 1]} : vector<2x96xf32> to vector<2x32xf32>
    %59 = vector.extract_strided_slice %45 {offsets = [0, 64], sizes = [2, 32], strides = [1, 1]} : vector<2x96xf32> to vector<2x32xf32>
    %60 = arith.mulf %56, %59 : vector<2x32xf32>
    %61 = arith.addf %58, %60 : vector<2x32xf32>
    %62 = math.tanh %61 : vector<2x32xf32>
    %cst_34 = arith.constant 1.000000e+00 : f32
    %63 = vector.broadcast %cst_34 : f32 to vector<2x32xf32>
    %64 = arith.subf %63, %57 : vector<2x32xf32>
    %65 = arith.mulf %64, %62 : vector<2x32xf32>
    %66 = arith.mulf %57, %1 : vector<2x32xf32>
    %67 = arith.addf %65, %66 : vector<2x32xf32>
    %c0_35 = arith.constant 0 : index
    %c0_36 = arith.constant 0 : index
    %68 = vector.load %arg13[%c0_35, %c0_36] : memref<32x64xf32, #tpu.memory_space<vmem>>, vector<32x64xf32>
    %cst_37 = arith.constant dense<0.000000e+00> : vector<2x64xf32>
    %69 = tpu.matmul %67, %68, %cst_37 {dimension_numbers = #tpu.dot_dimension_numbers<[1], [0], [0], [1], [0, 0, 1, 1], [], []>} : vector<2x32xf32>, vector<32x64xf32>, vector<2x64xf32> -> vector<2x64xf32>
    %c0_38 = arith.constant 0 : index
    %c0_39 = arith.constant 0 : index
    %70 = vector.load %arg14[%c0_38, %c0_39] : memref<64x64xf32, #tpu.memory_space<vmem>>, vector<64x64xf32>
    %cst_40 = arith.constant dense<0.000000e+00> : vector<2x64xf32>
    %71 = tpu.matmul %35, %70, %cst_40 {dimension_numbers = #tpu.dot_dimension_numbers<[1], [0], [0], [1], [0, 0, 1, 1], [], []>} : vector<2x64xf32>, vector<64x64xf32>, vector<2x64xf32> -> vector<2x64xf32>
    %72 = arith.addf %69, %71 : vector<2x64xf32>
    %c0_41 = arith.constant 0 : index
    %c0_42 = arith.constant 0 : index
    %73 = vector.load %arg15[%c0_41, %c0_42] : memref<1x64xf32, #tpu.memory_space<vmem>>, vector<1x64xf32>
    %74 = vector.broadcast %73 : vector<1x64xf32> to vector<2x64xf32>
    %75 = arith.addf %72, %74 : vector<2x64xf32>
    %cst_43 = arith.constant 0.000000e+00 : f32
    %76 = vector.broadcast %cst_43 : f32 to vector<2x24xf32>
    %77 = tpu.concatenate %75, %67, %29, %76 in 1 : vector<2x64xf32>, vector<2x32xf32>, vector<2x8xf32>, vector<2x24xf32> -> vector<2x128xf32>
    %c0_44 = arith.constant 0 : index
    %c0_45 = arith.constant 0 : index
    %78 = vector.load %arg16[%c0_44, %c0_45] : memref<2x128xf32, #tpu.memory_space<vmem>>, vector<2x128xf32>
    tpu.vector_store %arg16[%c0_44, %c0_45], %77 {strides = array<i32>} : memref<2x128xf32, #tpu.memory_space<vmem>>, vector<2x128xf32>,
    return
  }
  func.func @transform_0(%arg0: i32) -> (i32, i32) {
    %c0_i32 = arith.constant 0 : i32
    %c0_i32_0 = arith.constant 0 : i32
    %c0_i32_1 = arith.constant 0 : i32
    return %c0_i32, %c0_i32_0 : i32, i32
  }
  func.func @transform_1(%arg0: i32) -> (i32, i32) {
    %c0_i32 = arith.constant 0 : i32
    %c0_i32_0 = arith.constant 0 : i32
    %c0_i32_1 = arith.constant 0 : i32
    return %c0_i32, %c0_i32_0 : i32, i32
  }
  func.func @transform_2(%arg0: i32) -> (i32, i32) {
    %c0_i32 = arith.constant 0 : i32
    %c0_i32_0 = arith.constant 0 : i32
    %c0_i32_1 = arith.constant 0 : i32
    return %c0_i32, %c0_i32_0 : i32, i32
  }
  func.func @transform_3(%arg0: i32) -> (i32, i32, i32) {
    %c0_i32 = arith.constant 0 : i32
    %c0_i32_0 = arith.constant 0 : i32
    %c0_i32_1 = arith.constant 0 : i32
    %c0_i32_2 = arith.constant 0 : i32
    return %c0_i32, %c0_i32_0, %c0_i32_1 : i32, i32, i32
  }
  func.func @transform_4(%arg0: i32) -> (i32, i32) {
    %c0_i32 = arith.constant 0 : i32
    %c0_i32_0 = arith.constant 0 : i32
    %c0_i32_1 = arith.constant 0 : i32
    return %c0_i32, %c0_i32_0 : i32, i32
  }
  func.func @transform_5(%arg0: i32) -> (i32, i32) {
    %c0_i32 = arith.constant 0 : i32
    %c0_i32_0 = arith.constant 0 : i32
    %c0_i32_1 = arith.constant 0 : i32
    return %c0_i32, %c0_i32_0 : i32, i32
  }
  func.func @transform_6(%arg0: i32) -> (i32, i32) {
    %c0_i32 = arith.constant 0 : i32
    %c0_i32_0 = arith.constant 0 : i32
    %c0_i32_1 = arith.constant 0 : i32
    return %c0_i32, %c0_i32_0 : i32, i32
  }
  func.func @transform_7(%arg0: i32) -> (i32, i32) {
    %c0_i32 = arith.constant 0 : i32
    %c0_i32_0 = arith.constant 0 : i32
    %c0_i32_1 = arith.constant 0 : i32
    return %c0_i32, %c0_i32_0 : i32, i32
  }
  func.func @transform_8(%arg0: i32) -> (i32, i32) {
    %c0_i32 = arith.constant 0 : i32
    %c0_i32_0 = arith.constant 0 : i32
    %c0_i32_1 = arith.constant 0 : i32
    return %c0_i32, %c0_i32_0 : i32, i32
  }
  func.func @transform_9(%arg0: i32) -> (i32, i32) {
    %c0_i32 = arith.constant 0 : i32
    %c0_i32_0 = arith.constant 0 : i32
    %c0_i32_1 = arith.constant 0 : i32
    return %c0_i32, %c0_i32_0 : i32, i32
  }
  func.func @transform_10(%arg0: i32) -> (i32, i32) {
    %c0_i32 = arith.constant 0 : i32
    %c0_i32_0 = arith.constant 0 : i32
    %c0_i32_1 = arith.constant 0 : i32
    return %c0_i32, %c0_i32_0 : i32, i32
  }
  func.func @transform_11(%arg0: i32) -> (i32, i32) {
    %c0_i32 = arith.constant 0 : i32
    %c0_i32_0 = arith.constant 0 : i32
    %c0_i32_1 = arith.constant 0 : i32
    return %c0_i32, %c0_i32_0 : i32, i32
  }
  func.func @transform_12(%arg0: i32) -> (i32, i32) {
    %c0_i32 = arith.constant 0 : i32
    %c0_i32_0 = arith.constant 0 : i32
    %c0_i32_1 = arith.constant 0 : i32
    return %c0_i32, %c0_i32_0 : i32, i32
  }
  func.func @transform_13(%arg0: i32) -> (i32, i32) {
    %c0_i32 = arith.constant 0 : i32
    %c0_i32_0 = arith.constant 0 : i32
    %c0_i32_1 = arith.constant 0 : i32
    return %c0_i32, %c0_i32_0 : i32, i32
  }
  func.func @transform_14(%arg0: i32) -> (i32, i32) {
    %c0_i32 = arith.constant 0 : i32
    %c0_i32_0 = arith.constant 0 : i32
    %c0_i32_1 = arith.constant 0 : i32
    return %c0_i32, %c0_i32_0 : i32, i32
  }
  func.func @transform_15(%arg0: i32) -> (i32, i32) {
    %c0_i32 = arith.constant 0 : i32
    %c0_i32_0 = arith.constant 0 : i32
    %c0_i32_1 = arith.constant 0 : i32
    return %c0_i32, %c0_i32_0 : i32, i32
  }
}

</mosaic_0001>

<llo_original>
// kernel: tpu_custom_call.1
$region0: #{tpu_custom_call.1}
  #allocation0 [shape = 'u32[]', space=smem, size = 0x4, offset = 0x4, fixed_abs, tag = 'smem constant byte address 0x4 - core index']
  #allocation1 [shape = 'u32[144,128]{1,0:T(1,128)}', space=vmem, size = 0x12000, scoped, tag = 'internal scratch']
  %s0 = inlined_call_operand.hbm [shape: f32[2,32], index: 0, kind: input, shape index: {}]
  %s1 = inlined_call_operand.vmem [shape: f32[2,32], index: 1, kind: input, shape index: {}]
  %s2 = inlined_call_operand.hbm [shape: f32[16,32], index: 2, kind: input, shape index: {}]
  %s3 = inlined_call_operand.hbm [shape: f32[2,8,32], index: 3, kind: input, shape index: {}]
  %s4 = inlined_call_operand.hbm [shape: f32[32,32], index: 4, kind: input, shape index: {}]
  %s5 = inlined_call_operand.hbm [shape: f32[32,32], index: 5, kind: input, shape index: {}]
  %s6 = inlined_call_operand.vmem [shape: f32[1,32], index: 6, kind: input, shape index: {}]
  %s7 = inlined_call_operand.vmem [shape: f32[1,32], index: 7, kind: input, shape index: {}]
  %s8 = inlined_call_operand.hbm [shape: f32[64,96], index: 8, kind: input, shape index: {}]
  %s9 = inlined_call_operand.vmem [shape: f32[1,96], index: 9, kind: input, shape index: {}]
  %s10 = inlined_call_operand.vmem [shape: f32[32,96], index: 10, kind: input, shape index: {}]
  %s11 = inlined_call_operand.vmem [shape: f32[1,96], index: 11, kind: input, shape index: {}]
  %s12 = inlined_call_operand.hbm [shape: f32[32,64], index: 12, kind: input, shape index: {}]
  %s13 = inlined_call_operand.hbm [shape: f32[64,64], index: 13, kind: input, shape index: {}]
  %s14 = inlined_call_operand.vmem [shape: f32[1,64], index: 14, kind: input, shape index: {}]
  %s15 = inlined_call_operand.hbm [shape: f32[2,128], index: 15, kind: output, shape index: {}]
  %s16 = sld [smem:[#allocation0]]
  $region102: #{tpu_custom_call.1} parent=0
    _
  %s18 = ssub.s32 1, %s16
  %s19 = scalar_select 0, %s18, %s16
  $region1: #{tpu_custom_call.1} parent=0
    #allocation2 [shape = 'u8[1024]{0}', space=vmem, size = 0x400, scoped, tag = 'input window, operand 0, single buffered']
    #allocation3 [shape = 's32[1]{0}', space=sflag, size = 0x4, scoped, tag = 'scoped memory for tpu_custom_call.1']
    #allocation4 [shape = 's32[1]{0}', space=sflag, size = 0x4, scoped, tag = 'scoped memory for tpu_custom_call.1']
    #allocation5 [shape = 'u8[8192]{0}', space=vmem, size = 0x2000, scoped, tag = 'input window, operand 2, single buffered']
    #allocation6 [shape = 's32[1]{0}', space=sflag, size = 0x4, scoped, tag = 'scoped memory for tpu_custom_call.1']
    #allocation7 [shape = 'u8[8192]{0}', space=vmem, size = 0x2000, scoped, tag = 'input window, operand 3, single buffered']
    #allocation8 [shape = 'u8[16384]{0}', space=vmem, size = 0x4000, scoped, tag = 'input window, operand 4, single buffered']
    #allocation9 [shape = 's32[1]{0}', space=sflag, size = 0x4, scoped, tag = 'scoped memory for tpu_custom_call.1']
    #allocation10 [shape = 'u8[16384]{0}', space=vmem, size = 0x4000, scoped, tag = 'input window, operand 5, single buffered']
    #allocation11 [shape = 'u8[32768]{0}', space=vmem, size = 0x8000, scoped, tag = 'input window, operand 8, single buffered']
    #allocation12 [shape = 's32[1]{0}', space=sflag, size = 0x4, scoped, tag = 'scoped memory for tpu_custom_call.1']
    #allocation13 [shape = 'u8[16384]{0}', space=vmem, size = 0x4000, scoped, tag = 'input window, operand 12, single buffered']
    #allocation14 [shape = 'u8[32768]{0}', space=vmem, size = 0x8000, scoped, tag = 'input window, operand 13, single buffered']
    #allocation15 [shape = 's32[1]{0}', space=sflag, size = 0x4, scoped, tag = 'scoped memory for tpu_custom_call.1']
    #allocation16 [shape = 'u8[1024]{0}', space=vmem, size = 0x400, scoped, tag = 'output window, operand 0, single buffered']
    %20 = vsyncpa [#allocation3], 0
    %21 = vsyncpa [#allocation6], 0
    %22 = vsyncpa [#allocation9], 0
    %23 = vsyncpa [#allocation12], 0
    %24 = vsyncpa [#allocation15], 0
    %25 = vsyncpa [#allocation4], 0
    // Predicated region
    $region2: #{tpu_custom_call.1} parent=1 // pred_check
      _
    $region3: #{tpu_custom_call.1} parent=1 // pred_check_branch
      %27 = sbr.rel (0) target = $region5
    $region4: #{tpu_custom_call.1} parent=1 // pred_region
      %s29 = ssub.s32 32, 32
      %30 = vsyncadd [#allocation3], %s29
      %s32 = sshll.u32 [#allocation2], 4
      %s33 = int_to_ptr.vmem [resolvable:$true] %s32
      %35 = dma.hbm_to_vmem [thread:$0]  %s0, 32, %s33, [#allocation3]
    $region5: #{tpu_custom_call.1} parent=1 // pred_fallthru
      _
    // Predicated region
    $region6: #{tpu_custom_call.1} parent=1 // pred_check
      _
    $region7: #{tpu_custom_call.1} parent=1 // pred_check_branch
      %37 = sbr.rel (0) target = $region9
    $region8: #{tpu_custom_call.1} parent=1 // pred_region
      _
    $region9: #{tpu_custom_call.1} parent=1 // pred_fallthru
      _
    // Predicated region
    $region10: #{tpu_custom_call.1} parent=1 // pred_check
      _
    $region11: #{tpu_custom_call.1} parent=1 // pred_check_branch
      %39 = sbr.rel (0) target = $region13
    $region12: #{tpu_custom_call.1} parent=1 // pred_region
      %s41 = ssub.s32 256, 256
      %42 = vsyncadd [#allocation6], %s41
      %s43 = sshll.u32 [#allocation5], 4
      %s44 = int_to_ptr.vmem [resolvable:$true] %s43
      %49 = dma.hbm_to_vmem [thread:$0]  %s2, 256, %s44, [#allocation6], 128, 128, 8
    $region13: #{tpu_custom_call.1} parent=1 // pred_fallthru
      _
    // Predicated region
    $region14: #{tpu_custom_call.1} parent=1 // pred_check
      _
    $region15: #{tpu_custom_call.1} parent=1 // pred_check_branch
      %51 = sbr.rel (0) target = $region17
    $region16: #{tpu_custom_call.1} parent=1 // pred_region
      %s53 = ssub.s32 256, 256
      %54 = vsyncadd [#allocation6], %s53
      %s55 = sshll.u32 [#allocation7], 4
      %s56 = int_to_ptr.vmem [resolvable:$true] %s55
      %61 = dma.hbm_to_vmem [thread:$0]  %s3, 256, %s56, [#allocation6], 128, 128, 8
    $region17: #{tpu_custom_call.1} parent=1 // pred_fallthru
      _
    // Predicated region
    $region18: #{tpu_custom_call.1} parent=1 // pred_check
      _
    $region19: #{tpu_custom_call.1} parent=1 // pred_check_branch
      %63 = sbr.rel (0) target = $region21
    $region20: #{tpu_custom_call.1} parent=1 // pred_region
      %s65 = ssub.s32 512, 512
      %66 = vsyncadd [#allocation9], %s65
      %s67 = sshll.u32 [#allocation8], 4
      %s68 = int_to_ptr.vmem [resolvable:$true] %s67
      %73 = dma.hbm_to_vmem [thread:$0]  %s4, 512, %s68, [#allocation9], 128, 128, 8
    $region21: #{tpu_custom_call.1} parent=1 // pred_fallthru
      _
    // Predicated region
    $region22: #{tpu_custom_call.1} parent=1 // pred_check
      _
    $region23: #{tpu_custom_call.1} parent=1 // pred_check_branch
      %75 = sbr.rel (0) target = $region25
    $region24: #{tpu_custom_call.1} parent=1 // pred_region
      %s77 = ssub.s32 512, 512
      %78 = vsyncadd [#allocation9], %s77
      %s79 = sshll.u32 [#allocation10], 4
      %s80 = int_to_ptr.vmem [resolvable:$true] %s79
      %85 = dma.hbm_to_vmem [thread:$0]  %s5, 512, %s80, [#allocation9], 128, 128, 8
    $region25: #{tpu_custom_call.1} parent=1 // pred_fallthru
      _
    // Predicated region
    $region26: #{tpu_custom_call.1} parent=1 // pred_check
      _
    $region27: #{tpu_custom_call.1} parent=1 // pred_check_branch
      %87 = sbr.rel (0) target = $region29
    $region28: #{tpu_custom_call.1} parent=1 // pred_region
      _
    $region29: #{tpu_custom_call.1} parent=1 // pred_fallthru
      _
    // Predicated region
    $region30: #{tpu_custom_call.1} parent=1 // pred_check
      _
    $region31: #{tpu_custom_call.1} parent=1 // pred_check_branch
      %89 = sbr.rel (0) target = $region33
    $region32: #{tpu_custom_call.1} parent=1 // pred_region
      _
    $region33: #{tpu_custom_call.1} parent=1 // pred_fallthru
      _
    // Predicated region
    $region34: #{tpu_custom_call.1} parent=1 // pred_check
      _
    $region35: #{tpu_custom_call.1} parent=1 // pred_check_branch
      %91 = sbr.rel (0) target = $region37
    $region36: #{tpu_custom_call.1} parent=1 // pred_region
      %s93 = ssub.s32 1024, 1024
      %94 = vsyncadd [#allocation12], %s93
      %s95 = sshll.u32 [#allocation11], 4
      %s96 = int_to_ptr.vmem [resolvable:$true] %s95
      %101 = dma.hbm_to_vmem [thread:$0]  %s8, 1024, %s96, [#allocation12], 128, 128, 8
    $region37: #{tpu_custom_call.1} parent=1 // pred_fallthru
      _
    // Predicated region
    $region38: #{tpu_custom_call.1} parent=1 // pred_check
      _
    $region39: #{tpu_custom_call.1} parent=1 // pred_check_branch
      %103 = sbr.rel (0) target = $region41
    $region40: #{tpu_custom_call.1} parent=1 // pred_region
      _
    $region41: #{tpu_custom_call.1} parent=1 // pred_fallthru
      _
    // Predicated region
    $region42: #{tpu_custom_call.1} parent=1 // pred_check
      _
    $region43: #{tpu_custom_call.1} parent=1 // pred_check_branch
      %105 = sbr.rel (0) target = $region45
    $region44: #{tpu_custom_call.1} parent=1 // pred_region
      _
    $region45: #{tpu_custom_call.1} parent=1 // pred_fallthru
      _
    // Predicated region
    $region46: #{tpu_custom_call.1} parent=1 // pred_check
      _
    $region47: #{tpu_custom_call.1} parent=1 // pred_check_branch
      %107 = sbr.rel (0) target = $region49
    $region48: #{tpu_custom_call.1} parent=1 // pred_region
      _
    $region49: #{tpu_custom_call.1} parent=1 // pred_fallthru
      _
    // Predicated region
    $region50: #{tpu_custom_call.1} parent=1 // pred_check
      _
    $region51: #{tpu_custom_call.1} parent=1 // pred_check_branch
      %109 = sbr.rel (0) target = $region53
    $region52: #{tpu_custom_call.1} parent=1 // pred_region
      %s111 = ssub.s32 512, 512
      %112 = vsyncadd [#allocation12], %s111
      %s113 = sshll.u32 [#allocation13], 4
      %s114 = int_to_ptr.vmem [resolvable:$true] %s113
      %119 = dma.hbm_to_vmem [thread:$0]  %s12, 512, %s114, [#allocation12], 128, 128, 8
    $region53: #{tpu_custom_call.1} parent=1 // pred_fallthru
      _
    // Predicated region
    $region54: #{tpu_custom_call.1} parent=1 // pred_check
      _
    $region55: #{tpu_custom_call.1} parent=1 // pred_check_branch
      %121 = sbr.rel (0) target = $region57
    $region56: #{tpu_custom_call.1} parent=1 // pred_region
      %s123 = ssub.s32 1024, 1024
      %124 = vsyncadd [#allocation15], %s123
      %s125 = sshll.u32 [#allocation14], 4
      %s126 = int_to_ptr.vmem [resolvable:$true] %s125
      %131 = dma.hbm_to_vmem [thread:$0]  %s13, 1024, %s126, [#allocation15], 128, 128, 8
    $region57: #{tpu_custom_call.1} parent=1 // pred_fallthru
      _
    // Predicated region
    $region58: #{tpu_custom_call.1} parent=1 // pred_check
      _
    $region59: #{tpu_custom_call.1} parent=1 // pred_check_branch
      %133 = sbr.rel (0) target = $region61
    $region60: #{tpu_custom_call.1} parent=1 // pred_region
      _
    $region61: #{tpu_custom_call.1} parent=1 // pred_fallthru
      _
    // Predicated region
    $region62: #{tpu_custom_call.1} parent=1 // pred_check
      _
    $region63: #{tpu_custom_call.1} parent=1 // pred_check_branch
      %135 = sbr.rel (0) target = $region65
    $region64: #{tpu_custom_call.1} parent=1 // pred_region
      %136 = dma.done [#allocation3], 32
    $region65: #{tpu_custom_call.1} parent=1 // pred_fallthru
      _
    // Predicated region
    $region66: #{tpu_custom_call.1} parent=1 // pred_check
      _
    $region67: #{tpu_custom_call.1} parent=1 // pred_check_branch
      %138 = sbr.rel (0) target = $region69
    $region68: #{tpu_custom_call.1} parent=1 // pred_region
      %139 = dma.done [#allocation6], 256
    $region69: #{tpu_custom_call.1} parent=1 // pred_fallthru
      _
    // Predicated region
    $region70: #{tpu_custom_call.1} parent=1 // pred_check
      _
    $region71: #{tpu_custom_call.1} parent=1 // pred_check_branch
      %141 = sbr.rel (0) target = $region73
    $region72: #{tpu_custom_call.1} parent=1 // pred_region
      %142 = dma.done [#allocation6], 256
    $region73: #{tpu_custom_call.1} parent=1 // pred_fallthru
      _
    // Predicated region
    $region74: #{tpu_custom_call.1} parent=1 // pred_check
      _
    $region75: #{tpu_custom_call.1} parent=1 // pred_check_branch
      %144 = sbr.rel (0) target = $region77
    $region76: #{tpu_custom_call.1} parent=1 // pred_region
      %145 = dma.done [#allocation9], 512
    $region77: #{tpu_custom_call.1} parent=1 // pred_fallthru
      _
    // Predicated region
    $region78: #{tpu_custom_call.1} parent=1 // pred_check
      _
    $region79: #{tpu_custom_call.1} parent=1 // pred_check_branch
      %147 = sbr.rel (0) target = $region81
    $region80: #{tpu_custom_call.1} parent=1 // pred_region
      %148 = dma.done [#allocation9], 512
    $region81: #{tpu_custom_call.1} parent=1 // pred_fallthru
      _
    // Predicated region
    $region82: #{tpu_custom_call.1} parent=1 // pred_check
      _
    $region83: #{tpu_custom_call.1} parent=1 // pred_check_branch
      %150 = sbr.rel (0) target = $region85
    $region84: #{tpu_custom_call.1} parent=1 // pred_region
      %151 = dma.done [#allocation12], 1024
    $region85: #{tpu_custom_call.1} parent=1 // pred_fallthru
      _
    // Predicated region
    $region86: #{tpu_custom_call.1} parent=1 // pred_check
      _
    $region87: #{tpu_custom_call.1} parent=1 // pred_check_branch
      %153 = sbr.rel (0) target = $region89
    $region88: #{tpu_custom_call.1} parent=1 // pred_region
      %154 = dma.done [#allocation12], 512
    $region89: #{tpu_custom_call.1} parent=1 // pred_fallthru
      _
    // Predicated region
    $region90: #{tpu_custom_call.1} parent=1 // pred_check
      _
    $region91: #{tpu_custom_call.1} parent=1 // pred_check_branch
      %156 = sbr.rel (0) target = $region93
    $region92: #{tpu_custom_call.1} parent=1 // pred_region
      %157 = dma.done [#allocation15], 1024
    $region93: #{tpu_custom_call.1} parent=1 // pred_fallthru
      _
    %v158 = vld [vmem:[#allocation2] sm:$0x3]
    %v159 = vld [vmem:[%s1] sm:$0x3]
    %v160 = vld [vmem:[#allocation8] sm:$0xff]
    %v161 = vld [vmem:[#allocation8 + $0x8] sm:$0xff]
    %v162 = vld [vmem:[#allocation8 + $0x10] sm:$0xff]
    %v163 = vld [vmem:[#allocation8 + $0x18] sm:$0xff]
    %v164 = vld [vmem:[%s6] sm:$0x1]
    %v166 = vlaneseq
    %v167 = vshrl.u32 %v166, 7
    %v168 = vsub.s32 0, %v167
    %v169 = vrot.slane %v164, %v168
    %vm171 = vcmask 261120
    %v173 = vsel %vm171, %v159, 0
    %175 = vmatprep.subr.mxu0 0.0
    %176 = vmatpush1.msra.mxu0 %v160
    %177 = vmatprep.subr.mxu0 0.0
    %178 = vmatpush1.msra.mxu0 %v161
    %179 = vmatprep.subr.mxu0 0.0
    %180 = vmatpush1.msra.mxu0 %v162
    %181 = vmatprep.subr.mxu0 0.0
    %182 = vmatpush1.msra.mxu0 %v163
    %183 = vmatprep.subr.mxu0 0.0
    %184 = vmatpush1.msra.mxu0 0.0
    %185 = vmatprep.subr.mxu0 0.0
    %186 = vmatpush1.msra.mxu0 0.0
    %187 = vmatprep.subr.mxu0 0.0
    %188 = vmatpush1.msra.mxu0 0.0
    %189 = vmatprep.subr.mxu0 0.0
    %190 = vmatpush1.msra.mxu0 0.0
    %191 = vmatprep.subr.mxu0 0.0
    %192 = vmatpush1.msra.mxu0 0.0
    %193 = vmatprep.subr.mxu0 0.0
    %194 = vmatpush1.msra.mxu0 0.0
    %195 = vmatprep.subr.mxu0 0.0
    %196 = vmatpush1.msra.mxu0 0.0
    %197 = vmatprep.subr.mxu0 0.0
    %198 = vmatpush1.msra.mxu0 0.0
    %199 = vmatprep.subr.mxu0 0.0
    %200 = vmatpush1.msra.mxu0 0.0
    %201 = vmatprep.subr.mxu0 0.0
    %202 = vmatpush1.msra.mxu0 0.0
    %203 = vmatprep.subr.mxu0 0.0
    %204 = vmatpush1.msra.mxu0 0.0
    %205 = vmatprep.subr.mxu0 0.0
    %206 = vmatpush1.msra.mxu0 0.0
    %207 = vmatprep.subr.mxu0 0.0
    %208 = vmatpush1.msra.mxu0 0.0
    %209 = vmatprep.subr.mxu0 0.0
    %210 = vmatpush1.msra.mxu0 0.0
    %211 = vmatprep.subr.mxu0 0.0
    %212 = vmatpush1.msra.mxu0 0.0
    %213 = vmatprep.subr.mxu0 0.0
    %214 = vmatpush1.msra.mxu0 0.0
    %215 = vmatprep.subr.mxu0 0.0
    %216 = vmatpush1.msra.mxu0 0.0
    %217 = vmatprep.subr.mxu0 0.0
    %218 = vmatpush1.msra.mxu0 0.0
    %219 = vmatprep.subr.mxu0 0.0
    %220 = vmatpush1.msra.mxu0 0.0
    %221 = vmatprep.subr.mxu0 0.0
    %222 = vmatpush1.msra.mxu0 0.0
    %223 = vmatprep.subr.mxu0 0.0
    %224 = vmatpush1.msra.mxu0 0.0
    %225 = vmatprep.subr.mxu0 0.0
    %226 = vmatpush1.msra.mxu0 0.0
    %227 = vmatprep.subr.mxu0 0.0
    %228 = vmatpush1.msra.mxu0 0.0
    %229 = vmatprep.subr.mxu0 0.0
    %230 = vmatpush1.msra.mxu0 0.0
    %231 = vmatprep.subr.mxu0 0.0
    %232 = vmatpush1.msra.mxu0 0.0
    %233 = vmatprep.subr.mxu0 0.0
    %234 = vmatpush1.msra.mxu0 0.0
    %235 = vmatprep.subr.mxu0 0.0
    %236 = vmatpush1.msra.mxu0 0.0
    %237 = vmatprep.subr.mxu0 0.0
    %238 = vmatpush1.msra.mxu0 0.0
    %239 = vmatprep.mubr.f32.mxu0 0.0
    %240 = vmatmul.mubr.f32.gmra.mrb[0].mxu0 %v173
    %v241 = vpop.f32.mrb[0].mxu0
    %v242 = vadd.f32 %v169, %v241
    %v243 = vpop.f32.mrb[0].mxu0
    %244 = vdwg.mxu0
    %v245 = vld [vmem:[#allocation5] sm:$0xff]
    %v246 = vld [vmem:[#allocation5 + $0x8] sm:$0xff]
    %v247 = vld [vmem:[#allocation10] sm:$0xff]
    %v248 = vld [vmem:[#allocation10 + $0x8] sm:$0xff]
    %v249 = vld [vmem:[#allocation10 + $0x10] sm:$0xff]
    %v250 = vld [vmem:[#allocation10 + $0x18] sm:$0xff]
    %v252 = vsel %vm171, %v245, 0
    %v255 = vsel %vm171, %v246, 0
    %257 = vmatprep.subr.mxu0 0.0
    %258 = vmatpush1.msra.mxu0 %v247
    %259 = vmatprep.subr.mxu0 0.0
    %260 = vmatpush1.msra.mxu0 %v248
    %261 = vmatprep.subr.mxu0 0.0
    %262 = vmatpush1.msra.mxu0 %v249
    %263 = vmatprep.subr.mxu0 0.0
    %264 = vmatpush1.msra.mxu0 %v250
    %265 = vmatprep.subr.mxu0 0.0
    %266 = vmatpush1.msra.mxu0 0.0
    %267 = vmatprep.subr.mxu0 0.0
    %268 = vmatpush1.msra.mxu0 0.0
    %269 = vmatprep.subr.mxu0 0.0
    %270 = vmatpush1.msra.mxu0 0.0
    %271 = vmatprep.subr.mxu0 0.0
    %272 = vmatpush1.msra.mxu0 0.0
    %273 = vmatprep.subr.mxu0 0.0
    %274 = vmatpush1.msra.mxu0 0.0
    %275 = vmatprep.subr.mxu0 0.0
    %276 = vmatpush1.msra.mxu0 0.0
    %277 = vmatprep.subr.mxu0 0.0
    %278 = vmatpush1.msra.mxu0 0.0
    %279 = vmatprep.subr.mxu0 0.0
    %280 = vmatpush1.msra.mxu0 0.0
    %281 = vmatprep.subr.mxu0 0.0
    %282 = vmatpush1.msra.mxu0 0.0
    %283 = vmatprep.subr.mxu0 0.0
    %284 = vmatpush1.msra.mxu0 0.0
    %285 = vmatprep.subr.mxu0 0.0
    %286 = vmatpush1.msra.mxu0 0.0
    %287 = vmatprep.subr.mxu0 0.0
    %288 = vmatpush1.msra.mxu0 0.0
    %289 = vmatprep.subr.mxu0 0.0
    %290 = vmatpush1.msra.mxu0 0.0
    %291 = vmatprep.subr.mxu0 0.0
    %292 = vmatpush1.msra.mxu0 0.0
    %293 = vmatprep.subr.mxu0 0.0
    %294 = vmatpush1.msra.mxu0 0.0
    %295 = vmatprep.subr.mxu0 0.0
    %296 = vmatpush1.msra.mxu0 0.0
    %297 = vmatprep.subr.mxu0 0.0
    %298 = vmatpush1.msra.mxu0 0.0
    %299 = vmatprep.subr.mxu0 0.0
    %300 = vmatpush1.msra.mxu0 0.0
    %301 = vmatprep.subr.mxu0 0.0
    %302 = vmatpush1.msra.mxu0 0.0
    %303 = vmatprep.subr.mxu0 0.0
    %304 = vmatpush1.msra.mxu0 0.0
    %305 = vmatprep.subr.mxu0 0.0
    %306 = vmatpush1.msra.mxu0 0.0
    %307 = vmatprep.subr.mxu0 0.0
    %308 = vmatpush1.msra.mxu0 0.0
    %309 = vmatprep.subr.mxu0 0.0
    %310 = vmatpush1.msra.mxu0 0.0
    %311 = vmatprep.subr.mxu0 0.0
    %312 = vmatpush1.msra.mxu0 0.0
    %313 = vmatprep.subr.mxu0 0.0
    %314 = vmatpush1.msra.mxu0 0.0
    %315 = vmatprep.subr.mxu0 0.0
    %316 = vmatpush1.msra.mxu0 0.0
    %317 = vmatprep.subr.mxu0 0.0
    %318 = vmatpush1.msra.mxu0 0.0
    %319 = vmatprep.subr.mxu0 0.0
    %320 = vmatpush1.msra.mxu0 0.0
    %321 = vmatprep.mubr.f32.mxu0 0.0
    %322 = vmatmul.mubr.f32.gmra.mrb[0].mxu0 %v252
    %v323 = vpop.f32.mrb[0].mxu0
    %v324 = vadd.f32 0.0, %v323
    %v325 = vpop.f32.mrb[0].mxu0
    %326 = vmatprep.mubr.f32.mxu0 0.0
    %327 = vmatmul.mubr.f32.gmra.mrb[0].mxu0 %v255
    %v328 = vpop.f32.mrb[0].mxu0
    %v329 = vadd.f32 0.0, %v328
    %v330 = vpop.f32.mrb[0].mxu0
    %331 = vdwg.mxu0
    %v334 = vunpack.c.l.s4 1966171168
    %v335 = vunpack.c.0.s8 %v334
    %v336 = vlaneseq
    %v337 = vshrl.u32 %v336, 7
    %v338 = vsub.s32 %v335, %v337
    %v339 = vrot.slane %v242, %v338
    %v340 = vcombine.high %v339, %v339
    %v342 = vunpack.c.l.s4 1966171168
    %v343 = vunpack.c.0.s8 %v342
    %v344 = vlaneseq
    %v345 = vshrl.u32 %v344, 7
    %v346 = vsub.s32 %v343, %v345
    %v347 = vrot.slane %v339, %v346
    %v349 = vunpack.c.l.s4 1966171168
    %v350 = vunpack.c.0.s8 %v349
    %v351 = vlaneseq
    %v352 = vshrl.u32 %v351, 7
    %v353 = vsub.s32 %v350, %v352
    %v354 = vrot.slane %v340, %v353
    %v355 = vlaneseq
    %v356 = vshrl.u32 %v355, 7
    %v357 = vsub.s32 0, %v356
    %v358 = vrot.slane %v347, %v357
    %v359 = vlaneseq
    %v360 = vshrl.u32 %v359, 7
    %v361 = vsub.s32 0, %v360
    %v362 = vrot.slane %v354, %v361
    %v365 = vadd.f32 %v324, %v358
    %v366 = vadd.f32 %v329, %v362
    %v367 = vtanh.pop %v365
    %v368 = vtanh.pop %v366
    %v369 = vld [vmem:[%s7] sm:$0x1]
    %v371 = vlaneseq
    %v372 = vshrl.u32 %v371, 7
    %v373 = vsub.s32 0, %v372
    %v374 = vrot.slane %v369, %v373
    %v376 = vmul.f32 %v367, %v374
    %v377 = vmul.f32 %v368, %v374
    %v378 = vsel %vm171, %v376, 0.0
    %379 = vadd.xlane.f32.xlu0 %v378
    %v380 = vpop.xlane.xlu0 %379
    %v381 = vsel %vm171, %v377, 0.0
    %382 = vadd.xlane.f32.xlu0 %v381
    %v383 = vpop.xlane.xlu0 %382
    %v386 = vlaneseq
    %v387 = vand.u32 %v386, 127
    %v388 = vlaneseq
    %v389 = vshrl.u32 %v388, 7
    %v390 = vsub.s32 %v387, %v389
    %v391 = vrot.slane %v380, %v390
    %v392 = vlaneseq
    %v393 = vshrl.u32 %v392, 7
    %v394 = vsub.s32 %v387, %v393
    %v395 = vrot.slane %v383, %v394
    %vm396 = vcmask 1041409
    %v397 = vsel %vm396, %v395, %v391
    %vm399 = vcmask 58368
    %v400 = vsel %vm399, %v397, -inf
    %401 = vmax.xlane.f32.xlu0 %v400
    %v402 = vpop.xlane.xlu0 %401
    %v404 = vlaneseq
    %v405 = vshrl.u32 %v404, 7
    %v406 = vsub.s32 0, %v405
    %v407 = vrot.slane %v402, %v406
    %v408 = vlaneseq
    %v409 = vshrl.u32 %v408, 7
    %v410 = vsub.s32 1, %v409
    %v411 = vrot.slane %v402, %v410
    %v414 = vsub.f32 %v380, %v407
    %v415 = vsub.f32 %v383, %v411
    %v416 = vmul.f32 %v414, 1.442695
    %v417 = vpow.pop %v416
    %v418 = vmul.f32 %v415, 1.442695
    %v419 = vpow.pop %v418
    %422 = vset.pattern.permute.xlu0 0
    %423 = vperm.xlu0 %422, %v417
    %v424 = vpop.permute.xlu0 %423
    %425 = vset.pattern.permute.xlu0 0
    %426 = vperm.xlu0 %425, %v419
    %v427 = vpop.permute.xlu0 %426
    %v428 = vlaneseq
    %v429 = vshrl.u32 %v428, 7
    %v430 = vsub.s32 %v387, %v429
    %v431 = vrot.slane %v424, %v430
    %v432 = vlaneseq
    %v433 = vshrl.u32 %v432, 7
    %v434 = vsub.s32 %v387, %v433
    %v435 = vrot.slane %v427, %v434
    %v436 = vsel %vm396, %v435, %v431
    %v438 = vsel %vm399, %v436, 0.0
    %439 = vadd.xlane.f32.xlu0 %v438
    %v440 = vpop.xlane.xlu0 %439
    %v441 = vrcp.pop %v440
    %v443 = vlaneseq
    %v444 = vshrl.u32 %v443, 7
    %v445 = vsub.s32 0, %v444
    %v446 = vrot.slane %v441, %v445
    %v447 = vlaneseq
    %v448 = vshrl.u32 %v447, 7
    %v449 = vsub.s32 1, %v448
    %v450 = vrot.slane %v441, %v449
    %v453 = vmul.f32 %v417, %v446
    %v454 = vmul.f32 %v419, %v450
    %v455 = vld [vmem:[#allocation7] sm:$0xff]
    %v456 = vld [vmem:[#allocation7 + $0x8] sm:$0xff]
    %458 = vset.pattern.permute.xlu0 0
    %459 = vperm.xlu0 %458, %v453
    %v460 = vpop.permute.xlu0 %459
    %463 = vset.pattern.permute.xlu0 0
    %464 = vperm.xlu0 %463, %v454
    %v465 = vpop.permute.xlu0 %464
    %v467 = vmul.f32 %v460, %v455
    %v468 = vmul.f32 %v465, %v456
    %v469 = vsel %vm171, %v467, 0.0
    %v470 = vrot.slane %v469, 4
    %v471 = vadd.f32 %v469, %v470
    %v472 = vrot.slane %v471, 2
    %v473 = vadd.f32 %v471, %v472
    %v474 = vrot.slane %v473, 1
    %v475 = vadd.f32 %v473, %v474
    %v476 = vsel %vm171, %v468, 0.0
    %v477 = vrot.slane %v476, 4
    %v478 = vadd.f32 %v476, %v477
    %v479 = vrot.slane %v478, 2
    %v480 = vadd.f32 %v478, %v479
    %v481 = vrot.slane %v480, 1
    %v482 = vadd.f32 %v480, %v481
    %v485 = vsel %vm396, %v482, %v475
    %486 = vrot.lane.b32.xlu0 %v485, 32
    %v487 = vpop.permute.xlu0 %486
    %v489 = vsel %vm171, %v158, %v487
    %v490 = vld [vmem:[#allocation11] sm:$0xff]
    %v491 = vld [vmem:[#allocation11 + $0x8] sm:$0xff]
    %v492 = vld [vmem:[#allocation11 + $0x10] sm:$0xff]
    %v493 = vld [vmem:[#allocation11 + $0x18] sm:$0xff]
    %v494 = vld [vmem:[#allocation11 + $0x20] sm:$0xff]
    %v495 = vld [vmem:[#allocation11 + $0x28] sm:$0xff]
    %v496 = vld [vmem:[#allocation11 + $0x30] sm:$0xff]
    %v497 = vld [vmem:[#allocation11 + $0x38] sm:$0xff]
    %v498 = vld [vmem:[%s9] sm:$0x1]
    %v500 = vlaneseq
    %v501 = vshrl.u32 %v500, 7
    %v502 = vsub.s32 0, %v501
    %v503 = vrot.slane %v498, %v502
    %vm505 = vcmask 523264
    %v507 = vsel %vm505, %v489, 0
    %509 = vmatprep.subr.mxu0 0.0
    %510 = vmatpush1.msra.mxu0 %v490
    %511 = vmatprep.subr.mxu0 0.0
    %512 = vmatpush1.msra.mxu0 %v491
    %513 = vmatprep.subr.mxu0 0.0
    %514 = vmatpush1.msra.mxu0 %v492
    %515 = vmatprep.subr.mxu0 0.0
    %516 = vmatpush1.msra.mxu0 %v493
    %517 = vmatprep.subr.mxu0 0.0
    %518 = vmatpush1.msra.mxu0 %v494
    %519 = vmatprep.subr.mxu0 0.0
    %520 = vmatpush1.msra.mxu0 %v495
    %521 = vmatprep.subr.mxu0 0.0
    %522 = vmatpush1.msra.mxu0 %v496
    %523 = vmatprep.subr.mxu0 0.0
    %524 = vmatpush1.msra.mxu0 %v497
    %525 = vmatprep.subr.mxu0 0.0
    %526 = vmatpush1.msra.mxu0 0.0
    %527 = vmatprep.subr.mxu0 0.0
    %528 = vmatpush1.msra.mxu0 0.0
    %529 = vmatprep.subr.mxu0 0.0
    %530 = vmatpush1.msra.mxu0 0.0
    %531 = vmatprep.subr.mxu0 0.0
    %532 = vmatpush1.msra.mxu0 0.0
    %533 = vmatprep.subr.mxu0 0.0
    %534 = vmatpush1.msra.mxu0 0.0
    %535 = vmatprep.subr.mxu0 0.0
    %536 = vmatpush1.msra.mxu0 0.0
    %537 = vmatprep.subr.mxu0 0.0
    %538 = vmatpush1.msra.mxu0 0.0
    %539 = vmatprep.subr.mxu0 0.0
    %540 = vmatpush1.msra.mxu0 0.0
    %541 = vmatprep.subr.mxu0 0.0
    %542 = vmatpush1.msra.mxu0 0.0
    %543 = vmatprep.subr.mxu0 0.0
    %544 = vmatpush1.msra.mxu0 0.0
    %545 = vmatprep.subr.mxu0 0.0
    %546 = vmatpush1.msra.mxu0 0.0
    %547 = vmatprep.subr.mxu0 0.0
    %548 = vmatpush1.msra.mxu0 0.0
    %549 = vmatprep.subr.mxu0 0.0
    %550 = vmatpush1.msra.mxu0 0.0
    %551 = vmatprep.subr.mxu0 0.0
    %552 = vmatpush1.msra.mxu0 0.0
    %553 = vmatprep.subr.mxu0 0.0
    %554 = vmatpush1.msra.mxu0 0.0
    %555 = vmatprep.subr.mxu0 0.0
    %556 = vmatpush1.msra.mxu0 0.0
    %557 = vmatprep.subr.mxu0 0.0
    %558 = vmatpush1.msra.mxu0 0.0
    %559 = vmatprep.subr.mxu0 0.0
    %560 = vmatpush1.msra.mxu0 0.0
    %561 = vmatprep.subr.mxu0 0.0
    %562 = vmatpush1.msra.mxu0 0.0
    %563 = vmatprep.subr.mxu0 0.0
    %564 = vmatpush1.msra.mxu0 0.0
    %565 = vmatprep.subr.mxu0 0.0
    %566 = vmatpush1.msra.mxu0 0.0
    %567 = vmatprep.subr.mxu0 0.0
    %568 = vmatpush1.msra.mxu0 0.0
    %569 = vmatprep.subr.mxu0 0.0
    %570 = vmatpush1.msra.mxu0 0.0
    %571 = vmatprep.subr.mxu0 0.0
    %572 = vmatpush1.msra.mxu0 0.0
    %573 = vmatprep.mubr.f32.mxu0 0.0
    %574 = vmatmul.mubr.f32.gmra.mrb[0].mxu0 %v507
    %v575 = vpop.f32.mrb[0].mxu0
    %v576 = vadd.f32 %v503, %v575
    %v577 = vpop.f32.mrb[0].mxu0
    %578 = vdwg.mxu0
    %v579 = vld [vmem:[%s10] sm:$0xff]
    %v580 = vld [vmem:[%s10 + $0x8] sm:$0xff]
    %v581 = vld [vmem:[%s10 + $0x10] sm:$0xff]
    %v582 = vld [vmem:[%s10 + $0x18] sm:$0xff]
    %v583 = vld [vmem:[%s11] sm:$0x1]
    %v585 = vlaneseq
    %v586 = vshrl.u32 %v585, 7
    %v587 = vsub.s32 0, %v586
    %v588 = vrot.slane %v583, %v587
    %590 = vmatprep.subr.mxu0 0.0
    %591 = vmatpush1.msra.mxu0 %v579
    %592 = vmatprep.subr.mxu0 0.0
    %593 = vmatpush1.msra.mxu0 %v580
    %594 = vmatprep.subr.mxu0 0.0
    %595 = vmatpush1.msra.mxu0 %v581
    %596 = vmatprep.subr.mxu0 0.0
    %597 = vmatpush1.msra.mxu0 %v582
    %598 = vmatprep.subr.mxu0 0.0
    %599 = vmatpush1.msra.mxu0 0.0
    %600 = vmatprep.subr.mxu0 0.0
    %601 = vmatpush1.msra.mxu0 0.0
    %602 = vmatprep.subr.mxu0 0.0
    %603 = vmatpush1.msra.mxu0 0.0
    %604 = vmatprep.subr.mxu0 0.0
    %605 = vmatpush1.msra.mxu0 0.0
    %606 = vmatprep.subr.mxu0 0.0
    %607 = vmatpush1.msra.mxu0 0.0
    %608 = vmatprep.subr.mxu0 0.0
    %609 = vmatpush1.msra.mxu0 0.0
    %610 = vmatprep.subr.mxu0 0.0
    %611 = vmatpush1.msra.mxu0 0.0
    %612 = vmatprep.subr.mxu0 0.0
    %613 = vmatpush1.msra.mxu0 0.0
    %614 = vmatprep.subr.mxu0 0.0
    %615 = vmatpush1.msra.mxu0 0.0
    %616 = vmatprep.subr.mxu0 0.0
    %617 = vmatpush1.msra.mxu0 0.0
    %618 = vmatprep.subr.mxu0 0.0
    %619 = vmatpush1.msra.mxu0 0.0
    %620 = vmatprep.subr.mxu0 0.0
    %621 = vmatpush1.msra.mxu0 0.0
    %622 = vmatprep.subr.mxu0 0.0
    %623 = vmatpush1.msra.mxu0 0.0
    %624 = vmatprep.subr.mxu0 0.0
    %625 = vmatpush1.msra.mxu0 0.0
    %626 = vmatprep.subr.mxu0 0.0
    %627 = vmatpush1.msra.mxu0 0.0
    %628 = vmatprep.subr.mxu0 0.0
    %629 = vmatpush1.msra.mxu0 0.0
    %630 = vmatprep.subr.mxu0 0.0
    %631 = vmatpush1.msra.mxu0 0.0
    %632 = vmatprep.subr.mxu0 0.0
    %633 = vmatpush1.msra.mxu0 0.0
    %634 = vmatprep.subr.mxu0 0.0
    %635 = vmatpush1.msra.mxu0 0.0
    %636 = vmatprep.subr.mxu0 0.0
    %637 = vmatpush1.msra.mxu0 0.0
    %638 = vmatprep.subr.mxu0 0.0
    %639 = vmatpush1.msra.mxu0 0.0
    %640 = vmatprep.subr.mxu0 0.0
    %641 = vmatpush1.msra.mxu0 0.0
    %642 = vmatprep.subr.mxu0 0.0
    %643 = vmatpush1.msra.mxu0 0.0
    %644 = vmatprep.subr.mxu0 0.0
    %645 = vmatpush1.msra.mxu0 0.0
    %646 = vmatprep.subr.mxu0 0.0
    %647 = vmatpush1.msra.mxu0 0.0
    %648 = vmatprep.subr.mxu0 0.0
    %649 = vmatpush1.msra.mxu0 0.0
    %650 = vmatprep.subr.mxu0 0.0
    %651 = vmatpush1.msra.mxu0 0.0
    %652 = vmatprep.subr.mxu0 0.0
    %653 = vmatpush1.msra.mxu0 0.0
    %654 = vmatprep.mubr.f32.mxu0 0.0
    %655 = vmatmul.mubr.f32.gmra.mrb[0].mxu0 %v173
    %v656 = vpop.f32.mrb[0].mxu0
    %v657 = vadd.f32 %v588, %v656
    %v658 = vpop.f32.mrb[0].mxu0
    %659 = vdwg.mxu0
    %v660 = vadd.f32 %v576, %v657
    %v661 = vmul.f32 %v660, 0.5
    %v662 = vtanh.pop %v661
    %v663 = vmul.f32 %v662, 0.5
    %v664 = vadd.f32 %v663, 0.5
    %666 = vrot.lane.b32.xlu0 %v657, 64
    %v667 = vpop.permute.xlu0 %666
    %v669 = vmul.f32 %v664, %v667
    %671 = vrot.lane.b32.xlu0 %v669, 64
    %v672 = vpop.permute.xlu0 %671
    %v674 = vadd.f32 %v576, %v672
    %v675 = vtanh.pop %v674
    %v676 = vsub.f32 1.0, %v664
    %678 = vrot.lane.b32.xlu0 %v675, 96
    %v679 = vpop.permute.xlu0 %678
    %v681 = vmul.f32 %v676, %v679
    %682 = vrot.lane.b32.xlu0 %v159, 32
    %v683 = vpop.permute.xlu0 %682
    %v685 = vmul.f32 %v664, %v683
    %v686 = vadd.f32 %v681, %v685
    %v687 = vld [vmem:[#allocation13] sm:$0xff]
    %v688 = vld [vmem:[#allocation13 + $0x8] sm:$0xff]
    %v689 = vld [vmem:[#allocation13 + $0x10] sm:$0xff]
    %v690 = vld [vmem:[#allocation13 + $0x18] sm:$0xff]
    %v691 = vld [vmem:[#allocation14] sm:$0xff]
    %v692 = vld [vmem:[#allocation14 + $0x8] sm:$0xff]
    %v693 = vld [vmem:[#allocation14 + $0x10] sm:$0xff]
    %v694 = vld [vmem:[#allocation14 + $0x18] sm:$0xff]
    %v695 = vld [vmem:[#allocation14 + $0x20] sm:$0xff]
    %v696 = vld [vmem:[#allocation14 + $0x28] sm:$0xff]
    %v697 = vld [vmem:[#allocation14 + $0x30] sm:$0xff]
    %v698 = vld [vmem:[#allocation14 + $0x38] sm:$0xff]
    %699 = vmatprep.subr.mxu0 0.0
    %700 = vmatpush1.msra.mxu0 %v691
    %701 = vmatprep.subr.mxu0 0.0
    %702 = vmatpush1.msra.mxu0 %v692
    %703 = vmatprep.subr.mxu0 0.0
    %704 = vmatpush1.msra.mxu0 %v693
    %705 = vmatprep.subr.mxu0 0.0
    %706 = vmatpush1.msra.mxu0 %v694
    %707 = vmatprep.subr.mxu0 0.0
    %708 = vmatpush1.msra.mxu0 %v695
    %709 = vmatprep.subr.mxu0 0.0
    %710 = vmatpush1.msra.mxu0 %v696
    %711 = vmatprep.subr.mxu0 0.0
    %712 = vmatpush1.msra.mxu0 %v697
    %713 = vmatprep.subr.mxu0 0.0
    %714 = vmatpush1.msra.mxu0 %v698
    %715 = vmatprep.subr.mxu0 0.0
    %716 = vmatpush1.msra.mxu0 0.0
    %717 = vmatprep.subr.mxu0 0.0
    %718 = vmatpush1.msra.mxu0 0.0
    %719 = vmatprep.subr.mxu0 0.0
    %720 = vmatpush1.msra.mxu0 0.0
    %721 = vmatprep.subr.mxu0 0.0
    %722 = vmatpush1.msra.mxu0 0.0
    %723 = vmatprep.subr.mxu0 0.0
    %724 = vmatpush1.msra.mxu0 0.0
    %725 = vmatprep.subr.mxu0 0.0
    %726 = vmatpush1.msra.mxu0 0.0
    %727 = vmatprep.subr.mxu0 0.0
    %728 = vmatpush1.msra.mxu0 0.0
    %729 = vmatprep.subr.mxu0 0.0
    %730 = vmatpush1.msra.mxu0 0.0
    %731 = vmatprep.subr.mxu0 0.0
    %732 = vmatpush1.msra.mxu0 0.0
    %733 = vmatprep.subr.mxu0 0.0
    %734 = vmatpush1.msra.mxu0 0.0
    %735 = vmatprep.subr.mxu0 0.0
    %736 = vmatpush1.msra.mxu0 0.0
    %737 = vmatprep.subr.mxu0 0.0
    %738 = vmatpush1.msra.mxu0 0.0
    %739 = vmatprep.subr.mxu0 0.0
    %740 = vmatpush1.msra.mxu0 0.0
    %741 = vmatprep.subr.mxu0 0.0
    %742 = vmatpush1.msra.mxu0 0.0
    %743 = vmatprep.subr.mxu0 0.0
    %744 = vmatpush1.msra.mxu0 0.0
    %745 = vmatprep.subr.mxu0 0.0
    %746 = vmatpush1.msra.mxu0 0.0
    %747 = vmatprep.subr.mxu0 0.0
    %748 = vmatpush1.msra.mxu0 0.0
    %749 = vmatprep.subr.mxu0 0.0
    %750 = vmatpush1.msra.mxu0 0.0
    %751 = vmatprep.subr.mxu0 0.0
    %752 = vmatpush1.msra.mxu0 0.0
    %753 = vmatprep.subr.mxu0 0.0
    %754 = vmatpush1.msra.mxu0 0.0
    %755 = vmatprep.subr.mxu0 0.0
    %756 = vmatpush1.msra.mxu0 0.0
    %757 = vmatprep.subr.mxu0 0.0
    %758 = vmatpush1.msra.mxu0 0.0
    %759 = vmatprep.subr.mxu0 0.0
    %760 = vmatpush1.msra.mxu0 0.0
    %761 = vmatprep.subr.mxu0 0.0
    %762 = vmatpush1.msra.mxu0 0.0
    %763 = vmatprep.mubr.f32.mxu0 0.0
    %764 = vmatmul.mubr.f32.gmra.mrb[0].mxu0 %v507
    %v765 = vpop.f32.mrb[0].mxu0
    %v766 = vadd.f32 0.0, %v765
    %v767 = vpop.f32.mrb[0].mxu0
    %768 = vdwg.mxu0
    %770 = vrot.lane.b32.xlu0 %v686, 96
    %v771 = vpop.permute.xlu0 %770
    %v772 = vsel %vm171, %v771, 0
    %774 = vmatprep.subr.mxu0 0.0
    %775 = vmatpush1.msra.mxu0 %v687
    %776 = vmatprep.subr.mxu0 0.0
    %777 = vmatpush1.msra.mxu0 %v688
    %778 = vmatprep.subr.mxu0 0.0
    %779 = vmatpush1.msra.mxu0 %v689
    %780 = vmatprep.subr.mxu0 0.0
    %781 = vmatpush1.msra.mxu0 %v690
    %782 = vmatprep.subr.mxu0 0.0
    %783 = vmatpush1.msra.mxu0 0.0
    %784 = vmatprep.subr.mxu0 0.0
    %785 = vmatpush1.msra.mxu0 0.0
    %786 = vmatprep.subr.mxu0 0.0
    %787 = vmatpush1.msra.mxu0 0.0
    %788 = vmatprep.subr.mxu0 0.0
    %789 = vmatpush1.msra.mxu0 0.0
    %790 = vmatprep.subr.mxu0 0.0
    %791 = vmatpush1.msra.mxu0 0.0
    %792 = vmatprep.subr.mxu0 0.0
    %793 = vmatpush1.msra.mxu0 0.0
    %794 = vmatprep.subr.mxu0 0.0
    %795 = vmatpush1.msra.mxu0 0.0
    %796 = vmatprep.subr.mxu0 0.0
    %797 = vmatpush1.msra.mxu0 0.0
    %798 = vmatprep.subr.mxu0 0.0
    %799 = vmatpush1.msra.mxu0 0.0
    %800 = vmatprep.subr.mxu0 0.0
    %801 = vmatpush1.msra.mxu0 0.0
    %802 = vmatprep.subr.mxu0 0.0
    %803 = vmatpush1.msra.mxu0 0.0
    %804 = vmatprep.subr.mxu0 0.0
    %805 = vmatpush1.msra.mxu0 0.0
    %806 = vmatprep.subr.mxu0 0.0
    %807 = vmatpush1.msra.mxu0 0.0
    %808 = vmatprep.subr.mxu0 0.0
    %809 = vmatpush1.msra.mxu0 0.0
    %810 = vmatprep.subr.mxu0 0.0
    %811 = vmatpush1.msra.mxu0 0.0
    %812 = vmatprep.subr.mxu0 0.0
    %813 = vmatpush1.msra.mxu0 0.0
    %814 = vmatprep.subr.mxu0 0.0
    %815 = vmatpush1.msra.mxu0 0.0
    %816 = vmatprep.subr.mxu0 0.0
    %817 = vmatpush1.msra.mxu0 0.0
    %818 = vmatprep.subr.mxu0 0.0
    %819 = vmatpush1.msra.mxu0 0.0
    %820 = vmatprep.subr.mxu0 0.0
    %821 = vmatpush1.msra.mxu0 0.0
    %822 = vmatprep.subr.mxu0 0.0
    %823 = vmatpush1.msra.mxu0 0.0
    %824 = vmatprep.subr.mxu0 0.0
    %825 = vmatpush1.msra.mxu0 0.0
    %826 = vmatprep.subr.mxu0 0.0
    %827 = vmatpush1.msra.mxu0 0.0
    %828 = vmatprep.subr.mxu0 0.0
    %829 = vmatpush1.msra.mxu0 0.0
    %830 = vmatprep.subr.mxu0 0.0
    %831 = vmatpush1.msra.mxu0 0.0
    %832 = vmatprep.subr.mxu0 0.0
    %833 = vmatpush1.msra.mxu0 0.0
    %834 = vmatprep.subr.mxu0 0.0
    %835 = vmatpush1.msra.mxu0 0.0
    %836 = vmatprep.subr.mxu0 0.0
    %837 = vmatpush1.msra.mxu0 0.0
    %838 = vmatprep.mubr.f32.mxu0 0.0
    %839 = vmatmul.mubr.f32.gmra.mrb[0].mxu0 %v772
    %v840 = vpop.f32.mrb[0].mxu0
    %v841 = vadd.f32 %v766, %v840
    %v842 = vpop.f32.mrb[0].mxu0
    %843 = vdwg.mxu0
    %v844 = vld [vmem:[%s14] sm:$0x1]
    %v846 = vlaneseq
    %v847 = vshrl.u32 %v846, 7
    %v848 = vsub.s32 0, %v847
    %v849 = vrot.slane %v844, %v848
    %v851 = vadd.f32 %v841, %v849
    %852 = vrot.lane.b32.xlu0 %v686, 32
    %v853 = vpop.permute.xlu0 %852
    %v855 = vadd.s32 %v387, 4294967200
    %v856 = vlaneseq
    %v857 = vshrl.u32 %v856, 7
    %v858 = vsub.s32 %v855, %v857
    %v859 = vrot.slane %v460, %v858
    %v860 = vlaneseq
    %v861 = vshrl.u32 %v860, 7
    %v862 = vsub.s32 %v855, %v861
    %v863 = vrot.slane %v465, %v862
    %v864 = vsel %vm396, %v863, %v859
    %v866 = vsel %vm505, %v851, %v853
    %vm867 = vcmask 785408
    %v868 = vsel %vm867, %v866, %v864
    %vm869 = vcmask 850944
    %v870 = vsel %vm869, %v868, 0.0
    %871 = vst [vmem:[#allocation16] sm:$0x3] %v870
    // Predicated region
    $region94: #{tpu_custom_call.1} parent=1 // pred_check
      _
    $region95: #{tpu_custom_call.1} parent=1 // pred_check_branch
      %873 = sbr.rel (0) target = $region97
    $region96: #{tpu_custom_call.1} parent=1 // pred_region
      %s875 = ssub.s32 32, 32
      %876 = vsyncadd [#allocation4], %s875
      %s878 = sshll.u32 [#allocation16], 4
      %s879 = int_to_ptr.vmem [resolvable:$true] %s878
      %881 = dma.vmem_to_hbm [thread:$0]  %s879, 32, %s15, [#allocation4]
    $region97: #{tpu_custom_call.1} parent=1 // pred_fallthru
      _
    // Predicated region
    $region98: #{tpu_custom_call.1} parent=1 // pred_check
      _
    $region99: #{tpu_custom_call.1} parent=1 // pred_check_branch
      %883 = sbr.rel (0) target = $region101
    $region100: #{tpu_custom_call.1} parent=1 // pred_region
      %884 = dma.done [#allocation4], 32
    $region101: #{tpu_custom_call.1} parent=1 // pred_fallthru
      _
    %885 = vsyncpa [#allocation3], 1
    %886 = vsyncpa [#allocation6], 1
    %887 = vsyncpa [#allocation9], 1
    %888 = vsyncpa [#allocation12], 1
    %889 = vsyncpa [#allocation15], 1
    %890 = vsyncpa [#allocation4], 1

</llo_original>
